<compile_context>
chip_gen: v6e
topology: v6e:2x2x1
jax: 0.10.0
libtpu: 0.0.40
codegen_flags: <defaults>
</compile_context>

<pallas_src>
import math
import functools

import jax
import jax.numpy as jnp
import numpy as np
from jax import lax
from jax.experimental import pallas as pl
from jax.experimental.pallas import tpu as pltpu


def _arcface_kernel(x_ref, w_ref, invw_ref, t_ref, o_ref,
                    m_sc, l_sc, tgt_sc, invx_sc,
                    *, s, cos_m, sin_m, th, mm, bn):
    j = pl.program_id(1)
    nj = pl.num_programs(1)

    @pl.when(j == 0)
    def _init():
        x = x_ref[...].astype(jnp.float32)                         # (bm, dim)
        invx_sc[...] = lax.rsqrt(
            jnp.maximum(jnp.sum(x * x, axis=-1, keepdims=True), 1e-24))
        m_sc[...] = jnp.full_like(m_sc, -jnp.inf)
        l_sc[...] = jnp.zeros_like(l_sc)
        tgt_sc[...] = jnp.zeros_like(tgt_sc)

    # Raw (un-normalized) cosine numerator on the MXU: bf16 in, f32 out.
    raw = lax.dot_general(
        x_ref[...].astype(jnp.bfloat16), w_ref[...],
        dimension_numbers=(((1,), (1,)), ((), ())),
        preferred_element_type=jnp.float32)                        # (bm, bn)

    # Rank-1 inverse-norm scaling (f32): cos = raw / (|x| * |w|).
    cos = raw * invx_sc[...] * invw_ref[...]

    # Target-column mask (global class index vs. label).
    t = t_ref[...]                                                 # (bm,1) i32
    col = lax.broadcasted_iota(jnp.int32, cos.shape, 1) + j * bn
    mask = col == t                                                # (bm,bn) bool
    in_tile = jnp.logical_and(t >= j * bn, t < (j + 1) * bn)       # (bm,1) bool

    # ArcFace margin only for the target column ((bm, 1) math).
    cos_t = jnp.sum(jnp.where(mask, cos, 0.0), axis=-1, keepdims=True)
    sin_t = jnp.sqrt(jnp.maximum(1.0 - cos_t * cos_t, 0.0))        # clamp >= 0
    phi_t = cos_t * cos_m - sin_t * sin_m
    phi_t = jnp.where(cos_t > th, phi_t, cos_t - mm)

    logits = s * jnp.where(mask, phi_t, cos)                       # (bm, bn)
    tgt_sc[...] = tgt_sc[...] + jnp.where(in_tile, s * phi_t, 0.0)

    # Online logsumexp across class tiles.
    m_prev = m_sc[...]
    m_new = jnp.maximum(m_prev, jnp.max(logits, axis=-1, keepdims=True))
    alpha = jnp.exp(m_prev - m_new)
    l_sc[...] = alpha * l_sc[...] + jnp.sum(jnp.exp(logits - m_new),
                                            axis=-1, keepdims=True)
    m_sc[...] = m_new

    @pl.when(j == nj - 1)
    def _finalize():
        # Per-row cross-entropy: logsumexp(logits) - logits[target].
        o_ref[...] = (m_sc[...] + jnp.log(l_sc[...])) - tgt_sc[...]


def arcface_loss(x, weight, t, *, s=30.0, m=0.5, block_m=None, block_n=None):
    B, dim = x.shape
    n_class, dim_w = weight.shape
    assert dim == dim_w

    if block_m is None:
        block_m = B if B <= 128 else 128
    if block_n is None:
        block_n = n_class if n_class <= 512 else 512
    assert B % block_m == 0, (B, block_m)
    assert n_class % block_n == 0, (n_class, block_n)

    # Tiny side pass: per-class inverse norms (f32) + bf16 weight for the MXU.
    w_f32 = weight.astype(jnp.float32)
    inv_wnorm = lax.rsqrt(
        jnp.maximum(jnp.sum(w_f32 * w_f32, axis=1), 1e-24)).reshape(1, n_class)
    w_bf16 = weight.astype(jnp.bfloat16)
    # TODO(synk): labels could move to scalar-prefetch SMEM; kept as a
    # (block_m, 1) int32 VMEM block for robust vector compares.
    t2 = t.reshape(B, 1).astype(jnp.int32)

    kernel = functools.partial(
        _arcface_kernel,
        s=float(s), cos_m=math.cos(m), sin_m=math.sin(m),
        th=math.cos(math.pi - m), mm=math.sin(math.pi - m) * m,
        bn=block_n)

    grid = (B // block_m, n_class // block_n)
    per_row = pl.pallas_call(
        kernel,
        out_shape=jax.ShapeDtypeStruct((B, 1), jnp.float32),
        grid_spec=pltpu.PrefetchScalarGridSpec(
            num_scalar_prefetch=0,
            grid=grid,
            in_specs=[
                pl.BlockSpec((block_m, dim), lambda i, j: (i, 0)),   # x
                pl.BlockSpec((block_n, dim), lambda i, j: (j, 0)),   # weight
                pl.BlockSpec((1, block_n), lambda i, j: (0, j)),     # 1/|w|
                pl.BlockSpec((block_m, 1), lambda i, j: (i, 0)),     # labels
            ],
            out_specs=pl.BlockSpec((block_m, 1), lambda i, j: (i, 0)),
            scratch_shapes=[
                pltpu.VMEM((block_m, 1), jnp.float32),   # m_i (running max)
                pltpu.VMEM((block_m, 1), jnp.float32),   # l_i (running sum)
                pltpu.VMEM((block_m, 1), jnp.float32),   # target logit
                pltpu.VMEM((block_m, 1), jnp.float32),   # 1/|x| cache
            ]),
        compiler_params=pltpu.CompilerParams(
            dimension_semantics=("parallel", "arbitrary"),
            vmem_limit_bytes=32 * 1024 * 1024),
    )(x, w_bf16, inv_wnorm, t2)
    return jnp.mean(per_row)


def arcface_loss_ref(x, weight, t, *, s=30.0, m=0.5, matmul_dtype=jnp.float32):
    """Pure-JAX reference mirroring the PyTorch module.

    matmul_dtype=jnp.bfloat16 emulates the kernel's MXU precision.
    """
    cos_m, sin_m = math.cos(m), math.sin(m)
    th, mm = math.cos(math.pi - m), math.sin(math.pi - m) * m
    inv_xn = 1.0 / jnp.maximum(jnp.linalg.norm(x, axis=1, keepdims=True), 1e-12)
    inv_wn = 1.0 / jnp.maximum(
        jnp.linalg.norm(weight, axis=1, keepdims=True), 1e-12)
    raw = jnp.dot(x.astype(matmul_dtype), weight.astype(matmul_dtype).T,
                  preferred_element_type=jnp.float32)
    cos = raw * inv_xn * inv_wn.T
    sin = jnp.sqrt(jnp.maximum(1.0 - cos ** 2, 0.0))
    phi = cos * cos_m - sin * sin_m
    phi = jnp.where(cos > th, phi, cos - mm)
    one_hot = jax.nn.one_hot(t, weight.shape[0], dtype=jnp.float32)
    logits = (one_hot * phi + (1.0 - one_hot) * cos) * s
    logp = jax.nn.log_softmax(logits, axis=-1)
    return -jnp.mean(jnp.sum(one_hot * logp, axis=-1))


if __name__ == "__main__":
    B, dim, n_class = 16, 64, 256
    key = jax.random.PRNGKey(0)
    kx, kw, kt = jax.random.split(key, 3)

    x = jax.random.normal(kx, (B, dim), dtype=jnp.float32)
    # xavier_uniform_ on (n_class, dim): bound = sqrt(6 / (fan_in + fan_out))
    bound = math.sqrt(6.0 / (n_class + dim))
    weight = jax.random.uniform(
        kw, (n_class, dim), dtype=jnp.float32, minval=-bound, maxval=bound)
    t = jax.random.randint(kt, (B,), 0, n_class, dtype=jnp.int32)

    # block_m=8, block_n=128 -> grid (2, 2): exercises both the batch-parallel
    # axis and the online-LSE reduction over class tiles.
    loss = jax.block_until_ready(
        arcface_loss(x, weight, t, block_m=8, block_n=128))
    ref_bf16 = jax.block_until_ready(
        arcface_loss_ref(x, weight, t, matmul_dtype=jnp.bfloat16))
    ref_f32 = jax.block_until_ready(arcface_loss_ref(x, weight, t))

    assert np.isfinite(float(loss)), float(loss)
    # Tight check vs. a reference that emulates the kernel's bf16 MXU inputs.
    assert np.allclose(float(loss), float(ref_bf16), rtol=1e-2, atol=1e-2), (
        float(loss), float(ref_bf16))
    # Looser sanity check vs. the full-f32 PyTorch-equivalent reference.
    assert np.allclose(float(loss), float(ref_f32), rtol=5e-2, atol=5e-2), (
        float(loss), float(ref_f32))
    print("KERNEL_OK")
</pallas_src>

<mosaic_0001>
module attributes {stable_mosaic.version = 11 : i64} {
  func.func @_arcface_kernel(%arg0: i32, %arg1: i32, %arg2: memref<8x64xf32, #tpu.memory_space<vmem>>, %arg3: memref<128x64xbf16, #tpu.memory_space<vmem>>, %arg4: memref<1x128xf32, #tpu.memory_space<vmem>>, %arg5: memref<8x1xi32, #tpu.memory_space<vmem>>, %arg6: memref<8x1xf32, #tpu.memory_space<vmem>>, %arg7: memref<8x1xf32, #tpu.memory_space<vmem>>, %arg8: memref<8x1xf32, #tpu.memory_space<vmem>>, %arg9: memref<8x1xf32, #tpu.memory_space<vmem>>, %arg10: memref<8x1xf32, #tpu.memory_space<vmem>>) attributes {dimension_semantics = [#tpu.dimension_semantics<parallel>, #tpu.dimension_semantics<arbitrary>], iteration_bounds = array<i64: 2, 2>, scalar_prefetch = 0 : i64, scratch_operands = 4 : i64, tpu.core_type = #tpu.core_type<tc>, window_params = [{transform_indices = @transform_0, window_bounds = array<i64: 8, 64>}, {transform_indices = @transform_1, window_bounds = array<i64: 128, 64>}, {transform_indices = @transform_2, window_bounds = array<i64: 1, 128>}, {transform_indices = @transform_3, window_bounds = array<i64: 8, 1>}, {transform_indices = @transform_4, window_bounds = array<i64: 8, 1>}]} {
    %c0_i32 = arith.constant 0 : i32
    %0 = arith.cmpi eq, %arg1, %c0_i32 : i32
    %1 = arith.extui %0 : i1 to i32
    %c0_i32_0 = arith.constant 0 : i32
    %2 = arith.cmpi ne, %1, %c0_i32_0 : i32
    scf.if %2 {
      %c0_39 = arith.constant 0 : index
      %c0_40 = arith.constant 0 : index
      %79 = vector.load %arg2[%c0_39, %c0_40] : memref<8x64xf32, #tpu.memory_space<vmem>>, vector<8x64xf32>
      %80 = arith.mulf %79, %79 : vector<8x64xf32>
      %cst_41 = arith.constant dense<0.000000e+00> : vector<8xf32>
      %81 = vector.multi_reduction <add>, %80, %cst_41 [1] : vector<8x64xf32> to vector<8xf32>
      %82 = vector.shape_cast %81 : vector<8xf32> to vector<8x1xf32>
      %cst_42 = arith.constant 1.000000e-24 : f32
      %83 = vector.broadcast %cst_42 : f32 to vector<8x1xf32>
      %84 = arith.maximumf %82, %83 : vector<8x1xf32>
      %85 = math.rsqrt %84 : vector<8x1xf32>
      %c0_43 = arith.constant 0 : index
      %c0_44 = arith.constant 0 : index
      %86 = vector.load %arg10[%c0_43, %c0_44] : memref<8x1xf32, #tpu.memory_space<vmem>>, vector<8x1xf32>
      tpu.vector_store %arg10[%c0_43, %c0_44], %85 {strides = array<i32>} : memref<8x1xf32, #tpu.memory_space<vmem>>, vector<8x1xf32>,
      %cst_45 = arith.constant 0xFF800000 : f32
      %87 = vector.broadcast %cst_45 : f32 to vector<8x1xf32>
      %c0_46 = arith.constant 0 : index
      %c0_47 = arith.constant 0 : index
      %88 = vector.load %arg7[%c0_46, %c0_47] : memref<8x1xf32, #tpu.memory_space<vmem>>, vector<8x1xf32>
      tpu.vector_store %arg7[%c0_46, %c0_47], %87 {strides = array<i32>} : memref<8x1xf32, #tpu.memory_space<vmem>>, vector<8x1xf32>,
      %cst_48 = arith.constant 0.000000e+00 : f32
      %89 = vector.broadcast %cst_48 : f32 to vector<8x1xf32>
      %c0_49 = arith.constant 0 : index
      %c0_50 = arith.constant 0 : index
      %90 = vector.load %arg8[%c0_49, %c0_50] : memref<8x1xf32, #tpu.memory_space<vmem>>, vector<8x1xf32>
      tpu.vector_store %arg8[%c0_49, %c0_50], %89 {strides = array<i32>} : memref<8x1xf32, #tpu.memory_space<vmem>>, vector<8x1xf32>,
      %cst_51 = arith.constant 0.000000e+00 : f32
      %91 = vector.broadcast %cst_51 : f32 to vector<8x1xf32>
      %c0_52 = arith.constant 0 : index
      %c0_53 = arith.constant 0 : index
      %92 = vector.load %arg9[%c0_52, %c0_53] : memref<8x1xf32, #tpu.memory_space<vmem>>, vector<8x1xf32>
      tpu.vector_store %arg9[%c0_52, %c0_53], %91 {strides = array<i32>} : memref<8x1xf32, #tpu.memory_space<vmem>>, vector<8x1xf32>,
    } else {
    }
    %c0 = arith.constant 0 : index
    %c0_1 = arith.constant 0 : index
    %3 = vector.load %arg2[%c0, %c0_1] : memref<8x64xf32, #tpu.memory_space<vmem>>, vector<8x64xf32>
    %4 = arith.truncf %3 : vector<8x64xf32> to vector<8x64xbf16>
    %c0_2 = arith.constant 0 : index
    %c0_3 = arith.constant 0 : index
    %5 = vector.load %arg3[%c0_2, %c0_3] : memref<128x64xbf16, #tpu.memory_space<vmem>>, vector<128x64xbf16>
    %cst = arith.constant dense<0.000000e+00> : vector<8x128xf32>
    %6 = tpu.matmul %4, %5, %cst {dimension_numbers = #tpu.dot_dimension_numbers<[1], [1], [0], [0], [0, 0, 1, 0], [], []>} : vector<8x64xbf16>, vector<128x64xbf16>, vector<8x128xf32> -> vector<8x128xf32>
    %c0_4 = arith.constant 0 : index
    %c0_5 = arith.constant 0 : index
    %7 = vector.load %arg10[%c0_4, %c0_5] : memref<8x1xf32, #tpu.memory_space<vmem>>, vector<8x1xf32>
    %8 = vector.broadcast %7 : vector<8x1xf32> to vector<8x128xf32>
    %9 = arith.mulf %6, %8 : vector<8x128xf32>
    %c0_6 = arith.constant 0 : index
    %c0_7 = arith.constant 0 : index
    %10 = vector.load %arg4[%c0_6, %c0_7] : memref<1x128xf32, #tpu.memory_space<vmem>>, vector<1x128xf32>
    %11 = vector.broadcast %10 : vector<1x128xf32> to vector<8x128xf32>
    %12 = arith.mulf %9, %11 : vector<8x128xf32>
    %c0_8 = arith.constant 0 : index
    %c0_9 = arith.constant 0 : index
    %13 = vector.load %arg5[%c0_8, %c0_9] : memref<8x1xi32, #tpu.memory_space<vmem>>, vector<8x1xi32>
    %14 = tpu.iota {dimensions = array<i32: 1>} : vector<8x128xi32>
    %c128_i32 = arith.constant 128 : i32
    %15 = arith.muli %arg1, %c128_i32 : i32
    %16 = vector.broadcast %15 : i32 to vector<8x128xi32>
    %17 = arith.addi %14, %16 : vector<8x128xi32>
    %18 = vector.broadcast %13 : vector<8x1xi32> to vector<8x128xi32>
    %19 = arith.cmpi eq, %17, %18 : vector<8x128xi32>
    %c128_i32_10 = arith.constant 128 : i32
    %20 = arith.muli %arg1, %c128_i32_10 : i32
    %21 = vector.broadcast %20 : i32 to vector<8x1xi32>
    %22 = arith.cmpi sge, %13, %21 : vector<8x1xi32>
    %c1_i32 = arith.constant 1 : i32
    %23 = arith.addi %arg1, %c1_i32 : i32
    %c128_i32_11 = arith.constant 128 : i32
    %24 = arith.muli %23, %c128_i32_11 : i32
    %25 = vector.broadcast %24 : i32 to vector<8x1xi32>
    %26 = arith.cmpi slt, %13, %25 : vector<8x1xi32>
    %27 = arith.andi %22, %26 : vector<8x1xi1>
    %cst_12 = arith.constant 0.000000e+00 : f32
    %28 = vector.broadcast %cst_12 : f32 to vector<8x128xf32>
    %29 = arith.select %19, %12, %28 : vector<8x128xi1>, vector<8x128xf32>
    %cst_13 = arith.constant dense<0.000000e+00> : vector<8xf32>
    %30 = vector.multi_reduction <add>, %29, %cst_13 [1] : vector<8x128xf32> to vector<8xf32>
    %31 = vector.shape_cast %30 : vector<8xf32> to vector<8x1xf32>
    %32 = arith.mulf %31, %31 : vector<8x1xf32>
    %cst_14 = arith.constant 1.000000e+00 : f32
    %33 = vector.broadcast %cst_14 : f32 to vector<8x1xf32>
    %34 = arith.subf %33, %32 : vector<8x1xf32>
    %cst_15 = arith.constant 0.000000e+00 : f32
    %35 = vector.broadcast %cst_15 : f32 to vector<8x1xf32>
    %36 = arith.maximumf %34, %35 : vector<8x1xf32>
    %37 = math.sqrt %36 : vector<8x1xf32>
    %cst_16 = arith.constant 0.87758255 : f32
    %38 = vector.broadcast %cst_16 : f32 to vector<8x1xf32>
    %39 = arith.mulf %31, %38 : vector<8x1xf32>
    %cst_17 = arith.constant 0.47942555 : f32
    %40 = vector.broadcast %cst_17 : f32 to vector<8x1xf32>
    %41 = arith.mulf %37, %40 : vector<8x1xf32>
    %42 = arith.subf %39, %41 : vector<8x1xf32>
    %cst_18 = arith.constant -0.87758255 : f32
    %43 = vector.broadcast %cst_18 : f32 to vector<8x1xf32>
    %44 = arith.cmpf ogt, %31, %43 : vector<8x1xf32>
    %cst_19 = arith.constant 0.239712775 : f32
    %45 = vector.broadcast %cst_19 : f32 to vector<8x1xf32>
    %46 = arith.subf %31, %45 : vector<8x1xf32>
    %47 = arith.select %44, %42, %46 : vector<8x1xi1>, vector<8x1xf32>
    %48 = vector.shape_cast %47 : vector<8x1xf32> to vector<8x1xf32>
    %49 = vector.broadcast %48 : vector<8x1xf32> to vector<8x128xf32>
    %50 = arith.select %19, %49, %12 : vector<8x128xi1>, vector<8x128xf32>
    %cst_20 = arith.constant 3.000000e+01 : f32
    %51 = vector.broadcast %cst_20 : f32 to vector<8x128xf32>
    %52 = arith.mulf %51, %50 : vector<8x128xf32>
    %c0_21 = arith.constant 0 : index
    %c0_22 = arith.constant 0 : index
    %53 = vector.load %arg9[%c0_21, %c0_22] : memref<8x1xf32, #tpu.memory_space<vmem>>, vector<8x1xf32>
    %cst_23 = arith.constant 3.000000e+01 : f32
    %54 = vector.broadcast %cst_23 : f32 to vector<8x1xf32>
    %55 = arith.mulf %54, %47 : vector<8x1xf32>
    %cst_24 = arith.constant 0.000000e+00 : f32
    %56 = vector.broadcast %cst_24 : f32 to vector<8x1xf32>
    %57 = arith.select %27, %55, %56 : vector<8x1xi1>, vector<8x1xf32>
    %58 = arith.addf %53, %57 : vector<8x1xf32>
    %c0_25 = arith.constant 0 : index
    %c0_26 = arith.constant 0 : index
    %59 = vector.load %arg9[%c0_25, %c0_26] : memref<8x1xf32, #tpu.memory_space<vmem>>, vector<8x1xf32>
    tpu.vector_store %arg9[%c0_25, %c0_26], %58 {strides = array<i32>} : memref<8x1xf32, #tpu.memory_space<vmem>>, vector<8x1xf32>,
    %c0_27 = arith.constant 0 : index
    %c0_28 = arith.constant 0 : index
    %60 = vector.load %arg7[%c0_27, %c0_28] : memref<8x1xf32, #tpu.memory_space<vmem>>, vector<8x1xf32>
    %cst_29 = arith.constant dense<0xFF800000> : vector<8xf32>
    %61 = vector.multi_reduction <maximumf>, %52, %cst_29 [1] : vector<8x128xf32> to vector<8xf32>
    %62 = vector.shape_cast %61 : vector<8xf32> to vector<8x1xf32>
    %63 = arith.maximumf %60, %62 : vector<8x1xf32>
    %64 = arith.subf %60, %63 : vector<8x1xf32>
    %65 = math.exp %64 : vector<8x1xf32>
    %c0_30 = arith.constant 0 : index
    %c0_31 = arith.constant 0 : index
    %66 = vector.load %arg8[%c0_30, %c0_31] : memref<8x1xf32, #tpu.memory_space<vmem>>, vector<8x1xf32>
    %67 = arith.mulf %65, %66 : vector<8x1xf32>
    %68 = vector.broadcast %63 : vector<8x1xf32> to vector<8x128xf32>
    %69 = arith.subf %52, %68 : vector<8x128xf32>
    %70 = math.exp %69 : vector<8x128xf32>
    %cst_32 = arith.constant dense<0.000000e+00> : vector<8xf32>
    %71 = vector.multi_reduction <add>, %70, %cst_32 [1] : vector<8x128xf32> to vector<8xf32>
    %72 = vector.shape_cast %71 : vector<8xf32> to vector<8x1xf32>
    %73 = arith.addf %67, %72 : vector<8x1xf32>
    %c0_33 = arith.constant 0 : index
    %c0_34 = arith.constant 0 : index
    %74 = vector.load %arg8[%c0_33, %c0_34] : memref<8x1xf32, #tpu.memory_space<vmem>>, vector<8x1xf32>
    tpu.vector_store %arg8[%c0_33, %c0_34], %73 {strides = array<i32>} : memref<8x1xf32, #tpu.memory_space<vmem>>, vector<8x1xf32>,
    %c0_35 = arith.constant 0 : index
    %c0_36 = arith.constant 0 : index
    %75 = vector.load %arg7[%c0_35, %c0_36] : memref<8x1xf32, #tpu.memory_space<vmem>>, vector<8x1xf32>
    tpu.vector_store %arg7[%c0_35, %c0_36], %63 {strides = array<i32>} : memref<8x1xf32, #tpu.memory_space<vmem>>, vector<8x1xf32>,
    %c1_i32_37 = arith.constant 1 : i32
    %76 = arith.cmpi eq, %arg1, %c1_i32_37 : i32
    %77 = arith.extui %76 : i1 to i32
    %c0_i32_38 = arith.constant 0 : i32
    %78 = arith.cmpi ne, %77, %c0_i32_38 : i32
    scf.if %78 {
      %c0_39 = arith.constant 0 : index
      %c0_40 = arith.constant 0 : index
      %79 = vector.load %arg7[%c0_39, %c0_40] : memref<8x1xf32, #tpu.memory_space<vmem>>, vector<8x1xf32>
      %c0_41 = arith.constant 0 : index
      %c0_42 = arith.constant 0 : index
      %80 = vector.load %arg8[%c0_41, %c0_42] : memref<8x1xf32, #tpu.memory_space<vmem>>, vector<8x1xf32>
      %81 = math.log %80 : vector<8x1xf32>
      %82 = arith.addf %79, %81 : vector<8x1xf32>
      %c0_43 = arith.constant 0 : index
      %c0_44 = arith.constant 0 : index
      %83 = vector.load %arg9[%c0_43, %c0_44] : memref<8x1xf32, #tpu.memory_space<vmem>>, vector<8x1xf32>
      %84 = arith.subf %82, %83 : vector<8x1xf32>
      %c0_45 = arith.constant 0 : index
      %c0_46 = arith.constant 0 : index
      %85 = vector.load %arg6[%c0_45, %c0_46] : memref<8x1xf32, #tpu.memory_space<vmem>>, vector<8x1xf32>
      tpu.vector_store %arg6[%c0_45, %c0_46], %84 {strides = array<i32>} : memref<8x1xf32, #tpu.memory_space<vmem>>, vector<8x1xf32>,
    } else {
    }
    return
  }
  func.func @transform_0(%arg0: i32, %arg1: i32) -> (i32, i32) {
    %c0_i32 = arith.constant 0 : i32
    %c0_i32_0 = arith.constant 0 : i32
    return %arg0, %c0_i32 : i32, i32
  }
  func.func @transform_1(%arg0: i32, %arg1: i32) -> (i32, i32) {
    %c0_i32 = arith.constant 0 : i32
    %c0_i32_0 = arith.constant 0 : i32
    return %arg1, %c0_i32 : i32, i32
  }
  func.func @transform_2(%arg0: i32, %arg1: i32) -> (i32, i32) {
    %c0_i32 = arith.constant 0 : i32
    %c0_i32_0 = arith.constant 0 : i32
    return %c0_i32, %arg1 : i32, i32
  }
  func.func @transform_3(%arg0: i32, %arg1: i32) -> (i32, i32) {
    %c0_i32 = arith.constant 0 : i32
    %c0_i32_0 = arith.constant 0 : i32
    return %arg0, %c0_i32 : i32, i32
  }
  func.func @transform_4(%arg0: i32, %arg1: i32) -> (i32, i32) {
    %c0_i32 = arith.constant 0 : i32
    %c0_i32_0 = arith.constant 0 : i32
    return %arg0, %c0_i32 : i32, i32
  }
}

</mosaic_0001>

<llo_original>
// kernel: tpu_custom_call.1
$region0: #{tpu_custom_call.1}
  #allocation0 [shape = 'u32[]', space=smem, size = 0x4, offset = 0x4, fixed_abs, tag = 'smem constant byte address 0x4 - core index']
  #allocation1 [shape = 'u32[144,128]{1,0:T(1,128)}', space=vmem, size = 0x12000, scoped, tag = 'internal scratch']
  #allocation2 [shape = 'f32[8,1]{1,0:T(8,128)}', space=vmem, size = 0x1000, scoped, tag = 'scratch operand']
  #allocation3 [shape = 'f32[8,1]{1,0:T(8,128)}', space=vmem, size = 0x1000, scoped, tag = 'scratch operand']
  #allocation4 [shape = 'f32[8,1]{1,0:T(8,128)}', space=vmem, size = 0x1000, scoped, tag = 'scratch operand']
  #allocation5 [shape = 'f32[8,1]{1,0:T(8,128)}', space=vmem, size = 0x1000, scoped, tag = 'scratch operand']
  %s0 = inlined_call_operand.vmem [shape: f32[16,64], index: 0, kind: input, shape index: {}]
  %s1 = inlined_call_operand.vmem [shape: bf16[256,64], index: 1, kind: input, shape index: {}]
  %s2 = inlined_call_operand.vmem [shape: f32[1,256], index: 2, kind: input, shape index: {}]
  %s3 = inlined_call_operand.vmem [shape: s32[16,1], index: 3, kind: input, shape index: {}]
  %s4 = inlined_call_operand.vmem [shape: f32[16,1], index: 4, kind: output, shape index: {}]
  %s5 = sld [smem:[#allocation0]]
  $region57: #{tpu_custom_call.1} parent=0
    _
  %s7 = ssub.s32 1, %s5
  %s8 = scalar_select 0, %s7, %s5
  loop: start=0, step=1, limit=6
  $region2: #{tpu_custom_call.1} parent=0 // loop_pre_header
    _
  $region3: #{tpu_custom_call.1} parent=0 // loop_header
    %s10 = sphi 0, %s14
    %p11 = scmp.ge.s32.totalorder %s10, 6
    %s17 = sphi 0, %s29
    %s18 = sphi 0, %s25
    %s19 = sphi 0, %s17
    %s20 = sphi 0, %s18
    %s21 = sphi 0, %s19
    %s22 = sphi 0, %s20
    %s32 = sphi 0, %s34
    %s35 = sphi 0, %s32
    %s36 = sphi 0, %s35
    %s52 = sphi 0, %s36
    %s58 = sphi 0, %s60
    %s61 = sphi 0, %s58
    %s62 = sphi 0, %s61
    %s78 = sphi 0, %s62
    %s84 = sphi 0, %s86
    %s87 = sphi 0, %s84
    %s88 = sphi 0, %s87
    %s104 = sphi 0, %s88
    %s110 = sphi 0, %s112
    %s113 = sphi 0, %s110
    %s114 = sphi 0, %s113
    %s130 = sphi 0, %s114
    %s136 = sphi 0, %s138
    %s139 = sphi 0, %s136
    %s140 = sphi 0, %s139
    %s156 = sphi 0, %s140
  $region4: #{tpu_custom_call.1} parent=0 // loop_header_branch
    %13 = sbr.rel (%p11) target = $region8
  $region5: #{tpu_custom_call.1} parent=0 // loop_body
    %s15 = ssub.s32 %s10, 1
    %s16 = ssub.s32 %s10, 2
    %s23 = sadd.s32 1, %s18
    %p24 = scmp.ge.s32.totalorder %s23, 2
    %s25 = scalar_select %p24, 0, %s23
    %s26 = sadd.s32 1, %s17
    %s27 = scalar_select %p24, %s26, %s17
    %p28 = scmp.ge.s32.totalorder %s27, 2
    %s29 = scalar_select %p28, 0, %s27
    %s30 = ssub.s32 %s17, %s29
    %p31 = scmp.eq.s32.totalorder %s30, 0
    %s33 = sadd.s32 %s32, 1
    %s34 = scalar_select %p31, %s32, %s33
    %p37 = pneg %p31
    %p38 = scmp.eq.s32.totalorder %s10, 3
    %p39 = por %p37, %p38
    %p40 = scmp.ne.s32.totalorder %s32, %s35
    %p41 = scmp.eq.s32.totalorder %s10, 0
    %p42 = por %p40, %p41
    %p43 = scmp.ne.s32.totalorder %s32, %s35
    %p44 = scmp.eq.s32.totalorder %s15, 3
    %p45 = por %p43, %p44
    %p46 = scmp.ne.s32.totalorder %s35, %s36
    %p47 = scmp.eq.s32.totalorder %s15, 0
    %p48 = por %p46, %p47
    %p49 = scmp.ne.s32.totalorder %s35, %s36
    %p50 = scmp.eq.s32.totalorder %s16, 3
    %p51 = por %p49, %p50
    %p53 = scmp.ne.s32.totalorder %s36, %s52
    %p54 = scmp.eq.s32.totalorder %s16, 0
    %p55 = por %p53, %p54
    %s56 = ssub.s32 %s18, %s25
    %p57 = scmp.eq.s32.totalorder %s56, 0
    %s59 = sadd.s32 %s58, 1
    %s60 = scalar_select %p57, %s58, %s59
    %p63 = pneg %p57
    %p64 = scmp.eq.s32.totalorder %s10, 3
    %p65 = por %p63, %p64
    %p66 = scmp.ne.s32.totalorder %s58, %s61
    %p67 = scmp.eq.s32.totalorder %s10, 0
    %p68 = por %p66, %p67
    %p69 = scmp.ne.s32.totalorder %s58, %s61
    %p70 = scmp.eq.s32.totalorder %s15, 3
    %p71 = por %p69, %p70
    %p72 = scmp.ne.s32.totalorder %s61, %s62
    %p73 = scmp.eq.s32.totalorder %s15, 0
    %p74 = por %p72, %p73
    %p75 = scmp.ne.s32.totalorder %s61, %s62
    %p76 = scmp.eq.s32.totalorder %s16, 3
    %p77 = por %p75, %p76
    %p79 = scmp.ne.s32.totalorder %s62, %s78
    %p80 = scmp.eq.s32.totalorder %s16, 0
    %p81 = por %p79, %p80
    %s82 = ssub.s32 %s18, %s25
    %p83 = scmp.eq.s32.totalorder %s82, 0
    %s85 = sadd.s32 %s84, 1
    %s86 = scalar_select %p83, %s84, %s85
    %p89 = pneg %p83
    %p90 = scmp.eq.s32.totalorder %s10, 3
    %p91 = por %p89, %p90
    %p92 = scmp.ne.s32.totalorder %s84, %s87
    %p93 = scmp.eq.s32.totalorder %s10, 0
    %p94 = por %p92, %p93
    %p95 = scmp.ne.s32.totalorder %s84, %s87
    %p96 = scmp.eq.s32.totalorder %s15, 3
    %p97 = por %p95, %p96
    %p98 = scmp.ne.s32.totalorder %s87, %s88
    %p99 = scmp.eq.s32.totalorder %s15, 0
    %p100 = por %p98, %p99
    %p101 = scmp.ne.s32.totalorder %s87, %s88
    %p102 = scmp.eq.s32.totalorder %s16, 3
    %p103 = por %p101, %p102
    %p105 = scmp.ne.s32.totalorder %s88, %s104
    %p106 = scmp.eq.s32.totalorder %s16, 0
    %p107 = por %p105, %p106
    %s108 = ssub.s32 %s17, %s29
    %p109 = scmp.eq.s32.totalorder %s108, 0
    %s111 = sadd.s32 %s110, 1
    %s112 = scalar_select %p109, %s110, %s111
    %p115 = pneg %p109
    %p116 = scmp.eq.s32.totalorder %s10, 3
    %p117 = por %p115, %p116
    %p118 = scmp.ne.s32.totalorder %s110, %s113
    %p119 = scmp.eq.s32.totalorder %s10, 0
    %p120 = por %p118, %p119
    %p121 = scmp.ne.s32.totalorder %s110, %s113
    %p122 = scmp.eq.s32.totalorder %s15, 3
    %p123 = por %p121, %p122
    %p124 = scmp.ne.s32.totalorder %s113, %s114
    %p125 = scmp.eq.s32.totalorder %s15, 0
    %p126 = por %p124, %p125
    %p127 = scmp.ne.s32.totalorder %s113, %s114
    %p128 = scmp.eq.s32.totalorder %s16, 3
    %p129 = por %p127, %p128
    %p131 = scmp.ne.s32.totalorder %s114, %s130
    %p132 = scmp.eq.s32.totalorder %s16, 0
    %p133 = por %p131, %p132
    %s134 = ssub.s32 %s17, %s29
    %p135 = scmp.eq.s32.totalorder %s134, 0
    %s137 = sadd.s32 %s136, 1
    %s138 = scalar_select %p135, %s136, %s137
    %p141 = pneg %p135
    %p142 = scmp.eq.s32.totalorder %s10, 3
    %p143 = por %p141, %p142
    %p144 = scmp.ne.s32.totalorder %s136, %s139
    %p145 = scmp.eq.s32.totalorder %s10, 0
    %p146 = por %p144, %p145
    %p147 = scmp.ne.s32.totalorder %s136, %s139
    %p148 = scmp.eq.s32.totalorder %s15, 3
    %p149 = por %p147, %p148
    %p150 = scmp.ne.s32.totalorder %s139, %s140
    %p151 = scmp.eq.s32.totalorder %s15, 0
    %p152 = por %p150, %p151
    %p153 = scmp.ne.s32.totalorder %s139, %s140
    %p154 = scmp.eq.s32.totalorder %s16, 3
    %p155 = por %p153, %p154
    %p157 = scmp.ne.s32.totalorder %s140, %s156
    %p158 = scmp.eq.s32.totalorder %s16, 0
    %p159 = por %p157, %p158
    %p160 = scmp.le.s32.totalorder 1, %s10
    %p161 = scmp.lt.s32.totalorder %s10, 5
    %p162 = pnand %p160, %p161
    %p163 = pneg %p162
    // Predicated region
    $region9: #{tpu_custom_call.1} parent=5 // pred_check
      _
    $region10: #{tpu_custom_call.1} parent=5 // pred_check_branch
      %165 = sbr.rel (%p162) target = $region12
    $region11: #{tpu_custom_call.1} parent=5 // pred_region
      %s166 = ssub.s32 %s10, 1
    $region12: #{tpu_custom_call.1} parent=5 // pred_fallthru
      _
    %p167 = scmp.lt.s32.totalorder %s10, 4
    // Predicated region
    $region13: #{tpu_custom_call.1} parent=5 // pred_check
      %p168 = pneg %p167
    $region14: #{tpu_custom_call.1} parent=5 // pred_check_branch
      %170 = sbr.rel (%p168) target = $region16
    $region15: #{tpu_custom_call.1} parent=5 // pred_region
      // Predicated region
      $region17: #{tpu_custom_call.1} parent=15 // pred_check
        %p171 = pneg %p42
      $region18: #{tpu_custom_call.1} parent=15 // pred_check_branch
        %173 = sbr.rel (%p171) target = $region20
      $region19: #{tpu_custom_call.1} parent=15 // pred_region
        %p174 = scmp.lt.s32.totalorder %s17, 1
        %s175 = scalar_select %p174, %s17, 1
        %s176 = smul.addr %s175, 8
        %s177 = scalar_lea.vmem %s0, %s176
      $region20: #{tpu_custom_call.1} parent=15 // pred_fallthru
        _
      // Predicated region
      $region21: #{tpu_custom_call.1} parent=15 // pred_check
        %p178 = pneg %p68
      $region22: #{tpu_custom_call.1} parent=15 // pred_check_branch
        %180 = sbr.rel (%p178) target = $region24
      $region23: #{tpu_custom_call.1} parent=15 // pred_region
        %s181 = smul.u32 16, %s18
        %p182 = scmp.lt.s32.totalorder %s181, 31
        %s183 = scalar_select %p182, %s181, 31
        %s184 = smul.addr %s183, 4
        %s185 = scalar_lea.vmem %s1, %s184
        %s186 = smul.u32 16, %s18
      $region24: #{tpu_custom_call.1} parent=15 // pred_fallthru
        _
      // Predicated region
      $region25: #{tpu_custom_call.1} parent=15 // pred_check
        %p187 = pneg %p94
      $region26: #{tpu_custom_call.1} parent=15 // pred_check_branch
        %189 = sbr.rel (%p187) target = $region28
      $region27: #{tpu_custom_call.1} parent=15 // pred_region
        %p190 = scmp.lt.s32.totalorder %s18, 1
        %s191 = scalar_select %p190, %s18, 1
        %s192 = scalar_lea.vmem %s2, %s191
      $region28: #{tpu_custom_call.1} parent=15 // pred_fallthru
        _
      // Predicated region
      $region29: #{tpu_custom_call.1} parent=15 // pred_check
        %p193 = pneg %p120
      $region30: #{tpu_custom_call.1} parent=15 // pred_check_branch
        %195 = sbr.rel (%p193) target = $region32
      $region31: #{tpu_custom_call.1} parent=15 // pred_region
        %p196 = scmp.lt.s32.totalorder %s17, 1
        %s197 = scalar_select %p196, %s17, 1
        %s198 = smul.addr %s197, 8
        %s199 = scalar_lea.vmem %s3, %s198
      $region32: #{tpu_custom_call.1} parent=15 // pred_fallthru
        _
    $region16: #{tpu_custom_call.1} parent=5 // pred_fallthru
      _
    %p200 = scmp.le.s32.totalorder 1, %s10
    %p201 = scmp.lt.s32.totalorder %s10, 5
    %p202 = pnand %p200, %p201
    %p203 = pneg %p202
    // Predicated region
    $region33: #{tpu_custom_call.1} parent=5 // pred_check
      _
    $region34: #{tpu_custom_call.1} parent=5 // pred_check_branch
      %205 = sbr.rel (%p202) target = $region36
    $region35: #{tpu_custom_call.1} parent=5 // pred_region
      %s206 = ssub.s32 %s10, 1
      %p207 = scmp.lt.s32.totalorder %s19, 1
      %s208 = scalar_select %p207, %s19, 1
      %s209 = smul.addr %s208, 8
      %s210 = scalar_lea.vmem %s0, %s209
      %p211 = pneg %p48
      %p212 = pneg %p45
      %s213 = smul.u32 16, %s20
      %p214 = scmp.lt.s32.totalorder %s213, 31
      %s215 = scalar_select %p214, %s213, 31
      %s216 = smul.addr %s215, 4
      %s217 = scalar_lea.vmem %s1, %s216
      %p218 = pneg %p74
      %p219 = pneg %p71
      %p220 = scmp.lt.s32.totalorder %s20, 1
      %s221 = scalar_select %p220, %s20, 1
      %s222 = scalar_lea.vmem %s2, %s221
      %p223 = pneg %p100
      %p224 = pneg %p97
      %p225 = scmp.lt.s32.totalorder %s19, 1
      %s226 = scalar_select %p225, %s19, 1
      %s227 = smul.addr %s226, 8
      %s228 = scalar_lea.vmem %s3, %s227
      %p229 = pneg %p126
      %p230 = pneg %p123
      %p231 = pneg %p152
      %p232 = pneg %p149
      %p233 = scmp.lt.s32.totalorder %s19, 1
      %s234 = scalar_select %p233, %s19, 1
      %s235 = smul.addr %s234, 8
      %s236 = scalar_lea.vmem %s4, %s235
      %p237 = scmp.lt.s32.totalorder %s19, 1
      %s238 = scalar_select %p237, %s19, 1
      %s239 = smul.addr %s238, 8
      %s240 = scalar_lea.vmem %s0, %s239
      %s241 = smul.u32 16, %s20
      %p242 = scmp.lt.s32.totalorder %s241, 31
      %s243 = scalar_select %p242, %s241, 31
      %s244 = smul.addr %s243, 4
      %s245 = scalar_lea.vmem %s1, %s244
      %s246 = smul.u32 16, %s20
      %p247 = scmp.lt.s32.totalorder %s20, 1
      %s248 = scalar_select %p247, %s20, 1
      %s249 = scalar_lea.vmem %s2, %s248
      %p250 = scmp.lt.s32.totalorder %s19, 1
      %s251 = scalar_select %p250, %s19, 1
      %s252 = smul.addr %s251, 8
      %s253 = scalar_lea.vmem %s3, %s252
      %p254 = scmp.lt.s32.totalorder %s19, 1
      %s255 = scalar_select %p254, %s19, 1
      %s256 = smul.addr %s255, 8
      %s257 = scalar_lea.vmem %s4, %s256
      %p259 = scmp.eq.s32.totalorder %s20, 0
      // Predicated region
      $region37: #{tpu_custom_call.1} parent=35 // pred_check
        %p260 = pneg %p259
      $region38: #{tpu_custom_call.1} parent=35 // pred_check_branch
        %262 = sbr.rel (%p260) target = $region40
      $region39: #{tpu_custom_call.1} parent=35 // pred_region
        %v263 = vld [vmem:[%s240] sm:$0xff]
        %v264 = vmul.f32 %v263, %v263
        %vm265 = vcmask 523264
        %v266 = vsel %vm265, %v264, 0.0
        %267 = vadd.xlane.f32.xlu0 %v266
        %v268 = vpop.xlane.xlu0 %267
        %v269 = vmax.f32 %v268, 1e-24
        %v270 = vrsqrt.pop %v269
        %vm271 = vcmask 7168
        %272 = vst.msk [vmem:[#allocation5] sm:$0xff] %vm271, %v270
        %273 = vst.msk [vmem:[#allocation2] sm:$0xff] %vm271, -inf
        %274 = vst.msk [vmem:[#allocation3] sm:$0xff] %vm271, 0.0
        %275 = vst.msk [vmem:[#allocation4] sm:$0xff] %vm271, 0.0
      $region40: #{tpu_custom_call.1} parent=35 // pred_fallthru
        _
      %v276 = vld [vmem:[%s240] sm:$0xff]
      %v277 = vpack.c.bf16 %v276, %v276
      %v278 = vld [vmem:[%s245] sm:$0xf]
      %v279 = vld [vmem:[%s245 + $0x4] sm:$0xf]
      %v280 = vld [vmem:[%s245 + $0x8] sm:$0xf]
      %v281 = vld [vmem:[%s245 + $0xc] sm:$0xf]
      %v282 = vld [vmem:[%s245 + $0x10] sm:$0xf]
      %v283 = vld [vmem:[%s245 + $0x14] sm:$0xf]
      %v284 = vld [vmem:[%s245 + $0x18] sm:$0xf]
      %v285 = vld [vmem:[%s245 + $0x1c] sm:$0xf]
      %v286 = vld [vmem:[%s245 + $0x20] sm:$0xf]
      %v287 = vld [vmem:[%s245 + $0x24] sm:$0xf]
      %v288 = vld [vmem:[%s245 + $0x28] sm:$0xf]
      %v289 = vld [vmem:[%s245 + $0x2c] sm:$0xf]
      %v290 = vld [vmem:[%s245 + $0x30] sm:$0xf]
      %v291 = vld [vmem:[%s245 + $0x34] sm:$0xf]
      %v292 = vld [vmem:[%s245 + $0x38] sm:$0xf]
      %v293 = vld [vmem:[%s245 + $0x3c] sm:$0xf]
      %v310 = vunpack.c.l.b16 %v278
      %v311 = vunpack.c.l.b16 %v279
      %v312 = vunpack.c.l.b16 %v280
      %v313 = vunpack.c.l.b16 %v281
      %v314 = vunpack.c.l.b16 %v282
      %v315 = vunpack.c.l.b16 %v283
      %v316 = vunpack.c.l.b16 %v284
      %v317 = vunpack.c.l.b16 %v285
      %v318 = vunpack.c.l.b16 %v286
      %v319 = vunpack.c.l.b16 %v287
      %v320 = vunpack.c.l.b16 %v288
      %v321 = vunpack.c.l.b16 %v289
      %v322 = vunpack.c.l.b16 %v290
      %v323 = vunpack.c.l.b16 %v291
      %v324 = vunpack.c.l.b16 %v292
      %v325 = vunpack.c.l.b16 %v293
      %v326 = vpack.c.b16 %v311, %v310
      %v327 = vpack.c.b16 %v313, %v312
      %v328 = vpack.c.b16 %v315, %v314
      %v329 = vpack.c.b16 %v317, %v316
      %v330 = vpack.c.b16 %v319, %v318
      %v331 = vpack.c.b16 %v321, %v320
      %v332 = vpack.c.b16 %v323, %v322
      %v333 = vpack.c.b16 %v325, %v324
      %vm334 = vcmask 523264
      %v336 = vsel %vm334, %v277, 0
      %v339 = vsel %vm334, %v326, 0
      %v342 = vsel %vm334, %v327, 0
      %v345 = vsel %vm334, %v328, 0
      %v348 = vsel %vm334, %v329, 0
      %v351 = vsel %vm334, %v330, 0
      %v354 = vsel %vm334, %v331, 0
      %v357 = vsel %vm334, %v332, 0
      %v360 = vsel %vm334, %v333, 0
      %362 = vmatprep.subr.bf16.mxu0 0
      %363 = vmatpush1.bf16.xpose.msra.mxu0 %v360
      %364 = vmatprep.subr.bf16.mxu0 0
      %365 = vmatpush1.bf16.xpose.msra.mxu0 %v357
      %366 = vmatprep.subr.bf16.mxu0 0
      %367 = vmatpush1.bf16.xpose.msra.mxu0 %v354
      %368 = vmatprep.subr.bf16.mxu0 0
      %369 = vmatpush1.bf16.xpose.msra.mxu0 %v351
      %370 = vmatprep.subr.bf16.mxu0 0
      %371 = vmatpush1.bf16.xpose.msra.mxu0 %v348
      %372 = vmatprep.subr.bf16.mxu0 0
      %373 = vmatpush1.bf16.xpose.msra.mxu0 %v345
      %374 = vmatprep.subr.bf16.mxu0 0
      %375 = vmatpush1.bf16.xpose.msra.mxu0 %v342
      %376 = vmatprep.subr.bf16.mxu0 0
      %377 = vmatpush1.bf16.xpose.msra.mxu0 %v339
      %378 = vmatprep.subr.bf16.mxu0 0
      %379 = vmatpush2.bf16.xpose.msra.mxu0 0
      %380 = vmatprep.subr.bf16.mxu0 0
      %381 = vmatpush2.bf16.xpose.msra.mxu0 0
      %382 = vmatprep.subr.bf16.mxu0 0
      %383 = vmatpush2.bf16.xpose.msra.mxu0 0
      %384 = vmatprep.subr.bf16.mxu0 0
      %385 = vmatpush2.bf16.xpose.msra.mxu0 0
      %386 = vmatprep.subr.bf16.mxu0 0
      %387 = vmatpush2.bf16.xpose.msra.mxu0 0
      %388 = vmatprep.subr.bf16.mxu0 0
      %389 = vmatpush2.bf16.xpose.msra.mxu0 0
      %390 = vmatprep.subr.bf16.mxu0 0
      %391 = vmatpush2.bf16.xpose.msra.mxu0 0
      %392 = vmatprep.subr.bf16.mxu0 0
      %393 = vmatpush2.bf16.xpose.msra.mxu0 0
      %394 = vmatprep.mubr.bf16.mxu0 0
      %395 = vmatmul.mubr.bf16.gmra.mxu0 %v336
      %v396 = vpop.f32.mrf.mxu0
      %v397 = vadd.f32 0.0, %v396
      %v398 = vpop.f32.mrf.mxu0
      %v399 = vpop.f32.mrf.mxu0
      %v400 = vpop.f32.mrf.mxu0
      %401 = vdwg.mxu0
      %v402 = vld [vmem:[#allocation5] sm:$0xff]
      %404 = vset.pattern.permute.xlu0 0
      %405 = vperm.xlu0 %404, %v402
      %v406 = vpop.permute.xlu0 %405
      %v408 = vmul.f32 %v397, %v406
      %v409 = vld [vmem:[%s249] sm:$0x1]
      %v411 = vlaneseq
      %v412 = vshrl.u32 %v411, 7
      %v413 = vsub.s32 0, %v412
      %v414 = vrot.slane %v409, %v413
      %v416 = vmul.f32 %v408, %v414
      %v417 = vld [vmem:[%s253] sm:$0xff]
      %v418 = vlaneseq
      %v419 = vand.u32 %v418, 127
      %s420 = smul.u32 %s20, 128
      %v421 = vstv %s420
      %v422 = vadd.s32 %v419, %v421
      %423 = vset.pattern.permute.xlu0 0
      %424 = vperm.xlu0 %423, %v417
      %v425 = vpop.permute.xlu0 %424
      %vm426 = vcmp.eq.s32.totalorder %v422, %v425
      %vm427 = vcmp.ge.s32.totalorder %v417, %v421
      %s428 = sadd.s32 %s20, 1
      %s429 = smul.u32 %s428, 128
      %v430 = vstv %s429
      %vm431 = vcmp.lt.s32.totalorder %v417, %v430
      %vm432 = vmand %vm427, %vm431
      %v433 = vsel %vm426, %v416, 0.0
      %434 = vadd.xlane.f32.xlu0 %v433
      %v435 = vpop.xlane.xlu0 %434
      %v436 = vmul.f32 %v435, %v435
      %v437 = vsub.f32 1.0, %v436
      %v438 = vmax.f32 %v437, 0.0
      %v439 = vrsqrt.pop %v438
      %v440 = vmul.f32 %v438, %v439
      %vm441 = vcmp.eq.f32.partialorder %v438, inf
      %v442 = vsel %vm441, %v438, %v440
      %vm443 = vcmp.eq.f32.partialorder %v438, 0.0
      %v444 = vand.u32 %v438, 2147483648
      %v445 = vsel %vm443, %v444, %v442
      %v446 = vmul.f32 %v435, 0.87758255
      %v447 = vmul.f32 %v445, 0.47942555
      %v448 = vsub.f32 %v446, %v447
      %vm449 = vcmp.gt.f32.partialorder %v435, -0.87758255
      %v450 = vsub.f32 %v435, 0.23971277
      %v451 = vsel %vm449, %v448, %v450
      %v452 = vsel %vm426, %v451, %v416
      %v453 = vmul.f32 %v452, 30.0
      %v454 = vld [vmem:[#allocation4] sm:$0xff]
      %v455 = vmul.f32 %v451, 30.0
      %v456 = vsel %vm432, %v455, 0.0
      %v457 = vadd.f32 %v454, %v456
      %vm458 = vcmask 7168
      %459 = vst.msk [vmem:[#allocation4] sm:$0xff] %vm458, %v457
      %v460 = vld [vmem:[#allocation2] sm:$0xff]
      %461 = vmax.xlane.f32.xlu0 %v453
      %v462 = vpop.xlane.xlu0 %461
      %v463 = vmax.f32 %v460, %v462
      %v464 = vsub.f32 %v460, %v463
      %v465 = vmul.f32 %v464, 1.442695
      %v466 = vpow.pop %v465
      %v467 = vld [vmem:[#allocation3] sm:$0xff]
      %v468 = vmul.f32 %v466, %v467
      %470 = vset.pattern.permute.xlu0 0
      %471 = vperm.xlu0 %470, %v463
      %v472 = vpop.permute.xlu0 %471
      %v474 = vsub.f32 %v453, %v472
      %v475 = vmul.f32 %v474, 1.442695
      %v476 = vpow.pop %v475
      %477 = vadd.xlane.f32.xlu0 %v476
      %v478 = vpop.xlane.xlu0 %477
      %v479 = vadd.f32 %v468, %v478
      %480 = vst.msk [vmem:[#allocation3] sm:$0xff] %vm458, %v479
      %481 = vst.msk [vmem:[#allocation2] sm:$0xff] %vm458, %v463
      %p482 = scmp.eq.s32.totalorder %s20, 1
      // Predicated region
      $region41: #{tpu_custom_call.1} parent=35 // pred_check
        %p483 = pneg %p482
      $region42: #{tpu_custom_call.1} parent=35 // pred_check_branch
        %485 = sbr.rel (%p483) target = $region44
      $region43: #{tpu_custom_call.1} parent=35 // pred_region
        %v486 = vld [vmem:[#allocation2] sm:$0xff]
        %v487 = vld [vmem:[#allocation3] sm:$0xff]
        %v488 = vlog2.pop %v487
        %v489 = vmul.f32 %v488, 0.6931472
        %v490 = vadd.f32 %v486, %v489
        %v491 = vld [vmem:[#allocation4] sm:$0xff]
        %v492 = vsub.f32 %v490, %v491
        %493 = vst.msk [vmem:[%s257] sm:$0xff] %vm458, %v492
      $region44: #{tpu_custom_call.1} parent=35 // pred_fallthru
        _
      %p494 = scmp.lt.s32.totalorder %s19, 1
      %s495 = scalar_select %p494, %s19, 1
      %s496 = smul.addr %s495, 8
      %s497 = scalar_lea.vmem %s4, %s496
      // Predicated region
      $region45: #{tpu_custom_call.1} parent=35 // pred_check
        %p498 = pneg %p149
      $region46: #{tpu_custom_call.1} parent=35 // pred_check_branch
        %500 = sbr.rel (%p498) target = $region48
      $region47: #{tpu_custom_call.1} parent=35 // pred_region
        _
      $region48: #{tpu_custom_call.1} parent=35 // pred_fallthru
        _
    $region36: #{tpu_custom_call.1} parent=5 // pred_fallthru
      _
    %p501 = scmp.le.s32.totalorder 2, %s10
    // Predicated region
    $region49: #{tpu_custom_call.1} parent=5 // pred_check
      %p502 = pneg %p501
    $region50: #{tpu_custom_call.1} parent=5 // pred_check_branch
      %504 = sbr.rel (%p502) target = $region52
    $region51: #{tpu_custom_call.1} parent=5 // pred_region
      %s505 = ssub.s32 %s10, 2
      // Predicated region
      $region53: #{tpu_custom_call.1} parent=51 // pred_check
        %p506 = pneg %p155
      $region54: #{tpu_custom_call.1} parent=51 // pred_check_branch
        %508 = sbr.rel (%p506) target = $region56
      $region55: #{tpu_custom_call.1} parent=51 // pred_region
        %p509 = scmp.lt.s32.totalorder %s21, 1
        %s510 = scalar_select %p509, %s21, 1
        %s511 = smul.addr %s510, 8
        %s512 = scalar_lea.vmem %s4, %s511
      $region56: #{tpu_custom_call.1} parent=51 // pred_fallthru
        _
    $region52: #{tpu_custom_call.1} parent=5 // pred_fallthru
      _
  $region6: #{tpu_custom_call.1} parent=0 // loop_footer
    %s14 = sadd.s32 1, %s10
  $region7: #{tpu_custom_call.1} parent=0 // loop_footer_branch
    %9 = sbr.rel target = $region3
  $region8: #{tpu_custom_call.1} parent=0 // loop_exit
    _

</llo_original>
